<compile_context>
chip_gen: v5e
topology: v5e:2x2
jax: 0.10.0
libtpu: 0.0.40
codegen_flags: <defaults>
</compile_context>

<pallas_src>
import functools

import jax
import jax.numpy as jnp
import numpy as np
from jax.experimental import pallas as pl
from jax.experimental.pallas import tpu as pltpu

NEG_SLOPE = 0.2   # GATConv default negative_slope
BN_EPS = 1e-5     # BatchNorm1d default eps


# --------------------------------------------------------------------------- #
# Kernels
# --------------------------------------------------------------------------- #
def gat_prep_kernel(x_ref, w_ref, attn_ref, featp_ref, logits_ref):
    """feat = x @ W ; feat_plus = [feat | 1] ; logits = feat @ [a_dst | a_src]."""
    x = x_ref[...].astype(jnp.bfloat16)                                  # [tm, in]
    feat = jnp.dot(x, w_ref[...], preferred_element_type=jnp.float32)   # [tm, hf]
    ones = jnp.ones((feat.shape[0], 1), jnp.bfloat16)
    featp_ref[...] = jnp.concatenate([feat.astype(jnp.bfloat16), ones], axis=-1)
    # single fused matmul for both attention logit sets -> one [tm, 2H] store
    logits_ref[...] = jnp.dot(feat, attn_ref[...],
                              preferred_element_type=jnp.float32)


def gat_attn_kernel(adj_ref, adst_ref, amax_ref, asrct_ref, featp_ref, bias_ref,
                    *rest, num_heads, out_dim, ep_dtype, fuse_relu, fuse_residual):
    """Edge-softmax attention + aggregation for one (dest-row tile, src chunk)."""
    if fuse_residual:
        x_ref, o_ref, acc_ref = rest
    else:
        o_ref, acc_ref = rest
        x_ref = None

    k = pl.program_id(1)
    hf = num_heads * out_dim

    @pl.when(k == 0)
    def _init():
        acc_ref[...] = jnp.zeros_like(acc_ref)

    adj = adj_ref[...].astype(ep_dtype)            # [tm, tn] 0/1 (int8 stream)
    adst = adst_ref[...]                           # [tm, H]  f32
    asrct = asrct_ref[...].astype(ep_dtype)        # [H, tn]
    featp = featp_ref[...]                         # [tn, hf+1] bf16 (last col = 1)

    # Scalar softmax bound (leaky-ReLU is monotone): m >= max_j e[i, j].
    mb = adst + amax_ref[...]                      # [tm, H] f32
    mb = jnp.maximum(mb, NEG_SLOPE * mb)
    adst_e = adst.astype(ep_dtype)
    mb_e = mb.astype(ep_dtype)

    for h in range(num_heads):
        s = adst_e[:, h:h + 1] + asrct[h:h + 1, :]          # [tm, tn]
        e = jnp.maximum(s, NEG_SLOPE * s)                   # leaky-ReLU
        # exp args <= ~0 by construction; non-edges zeroed by the adj multiply.
        p = jnp.exp(e - mb_e[:, h:h + 1]) * adj             # [tm, tn]
        # Aggregation on the MXU; the ones column of featp makes the last output
        # column the softmax denominator (free: output width << 128 MXU lanes).
        res = jnp.dot(p.astype(jnp.bfloat16), featp,
                      preferred_element_type=jnp.float32)   # [tm, hf+1]
        acc_ref[h] = acc_ref[h] + res

    @pl.when(k == pl.num_programs(1) - 1)
    def _finalize():
        cols = jax.lax.broadcasted_iota(jnp.int32, (1, hf), 1)
        out = jnp.zeros(o_ref.shape, jnp.float32)
        for h in range(num_heads):
            res = acc_ref[h]                                # [tm, hf+1]
            denom = res[:, hf:hf + 1]                       # fused row-sum of p
            # exact reciprocal: tiny [tm, 1], removes the approx-recip bias;
            # max() guards degree-0 / fully-underflowed rows (output -> 0).
            scale = 1.0 / jnp.maximum(denom, 1e-20)
            colmask = jnp.logical_and(cols >= h * out_dim,
                                      cols < (h + 1) * out_dim).astype(jnp.float32)
            out = out + res[:, :hf] * (scale * colmask)
        out = out + bias_ref[...]
        if fuse_relu:
            out = jnp.maximum(out, 0.0)
            if fuse_residual:
                out = out + x_ref[...]
        o_ref[...] = out                                    # one lane-dense store


def bn_stats_kernel(h_ref, stats_ref, *, tile_m, n_real):
    """Accumulate per-feature sum / sum-of-squares over the real (unpadded) rows."""
    i = pl.program_id(0)

    @pl.when(i == 0)
    def _init():
        stats_ref[...] = jnp.zeros_like(stats_ref)

    h = h_ref[...]
    rows = jax.lax.broadcasted_iota(jnp.int32, h.shape, 0) + i * tile_m
    h = jnp.where(rows < n_real, h, 0.0)
    s = jnp.sum(h, axis=0, keepdims=True)
    ss = jnp.sum(h * h, axis=0, keepdims=True)
    stats_ref[...] = stats_ref[...] + jnp.concatenate([s, ss], axis=0)


def bn_apply_kernel(h_ref, stats_ref, gamma_ref, beta_ref, x_ref, o_ref,
                    *, n_real, residual):
    """BatchNorm (batch statistics) + ReLU + optional residual, row-tiled."""
    h = h_ref[...]
    stats = stats_ref[...]
    inv_n = 1.0 / float(n_real)
    mean = stats[0:1, :] * inv_n
    var = jnp.maximum(stats[1:2, :] * inv_n - mean * mean, 0.0)
    h = (h - mean) * jax.lax.rsqrt(var + BN_EPS) * gamma_ref[...] + beta_ref[...]
    h = jnp.maximum(h, 0.0)
    if residual:
        h = h + x_ref[...]
    o_ref[...] = h


# --------------------------------------------------------------------------- #
# Wrapper
# --------------------------------------------------------------------------- #
def _softmax_dtype():
    """bf16 e/p chain only on chips with bf16 VALU/EUP (v6e / v7x); f32 elsewhere."""
    try:
        kind = jax.devices()[0].device_kind.lower()
    except Exception:
        return jnp.float32
    if any(tag in kind for tag in ("v6", "v7", "7x")):
        return jnp.bfloat16
    return jnp.float32


def _pick_tile(desired, n_pad):
    t = min(desired, n_pad)
    t = max(128, (t // 128) * 128)
    t = min(t, n_pad)
    while n_pad % t:
        t -= 128
    return t


def _attn_vmem_limit(tm, tn, hf, num_heads, in_dim, fuse_residual):
    """Explicit buffer budget (double-buffered inputs/outputs + accumulator)."""
    b = (2 * tm * tn                    # adj int8
         + 2 * tn * (hf + 1) * 2        # feat_plus bf16
         + 2 * num_heads * tn * 4       # a_src^T
         + 2 * tm * num_heads * 4       # a_dst
         + 2 * tm * hf * 4              # output tile
         + num_heads * tm * (hf + 1) * 4)   # accumulator scratch
    if fuse_residual:
        b += 2 * tm * in_dim * 4
    b += 2 << 20                        # small operands + compiler slack
    return int(max(16 << 20, min(b * 3 // 2, 64 << 20)))


def gat_layer(x, adj, w, att_src, att_dst, bias, gamma, beta, *,
              num_heads, out_dim, batch_norm, residual,
              tile_m=256, tile_n=512, softmax_dtype=None):
    N, in_dim = x.shape
    hf = num_heads * out_dim
    if in_dim != hf:                    # mirrors GATLayer.__init__
        residual = False
    ep_dtype = _softmax_dtype() if softmax_dtype is None else softmax_dtype

    bias = bias.reshape(1, hf).astype(jnp.float32)
    gamma = gamma.reshape(1, hf).astype(jnp.float32)
    beta = beta.reshape(1, hf).astype(jnp.float32)

    # ---- pad N to a multiple of 128 (pad rows/cols are edge-free) ---------- #
    N_pad = ((N + 127) // 128) * 128
    if N_pad != N:
        x_p = jnp.zeros((N_pad, in_dim), x.dtype).at[:N].set(x)
        adj_p = jnp.zeros((N_pad, N_pad), adj.dtype).at[:N, :N].set(adj)
    else:
        x_p, adj_p = x, adj
    adj_i8 = (adj_p > 0).astype(jnp.int8)          # O(N^2) stream in 1 byte/elem

    tm = _pick_tile(tile_m, N_pad)
    tn = _pick_tile(tile_n, N_pad)
    grid_m = N_pad // tm
    grid_n = N_pad // tn

    # Block-diagonal attention matrices fused into one operand:
    #   attn_mat[h*F + f, h]     = att_dst[h, f]
    #   attn_mat[h*F + f, H + h] = att_src[h, f]
    eye_h = jnp.eye(num_heads, dtype=jnp.float32)
    adst_mat = (att_dst[:, :, None] * eye_h[:, None, :]).reshape(hf, num_heads)
    asrc_mat = (att_src[:, :, None] * eye_h[:, None, :]).reshape(hf, num_heads)
    attn_mat = jnp.concatenate([adst_mat, asrc_mat], axis=1)   # [hf, 2H]
    w_bf16 = w.astype(jnp.bfloat16)

    par = pltpu.CompilerParams(dimension_semantics=("parallel",))

    # ---- 1) projection + fused attention logits ---------------------------- #
    featp, logits = pl.pallas_call(
        gat_prep_kernel,
        out_shape=(jax.ShapeDtypeStruct((N_pad, hf + 1), jnp.bfloat16),
                   jax.ShapeDtypeStruct((N_pad, 2 * num_heads), jnp.float32)),
        grid=(grid_m,),
        in_specs=[pl.BlockSpec((tm, in_dim), lambda i: (i, 0)),
                  pl.BlockSpec((in_dim, hf), lambda i: (0, 0)),
                  pl.BlockSpec((hf, 2 * num_heads), lambda i: (0, 0))],
        out_specs=(pl.BlockSpec((tm, hf + 1), lambda i: (i, 0)),
                   pl.BlockSpec((tm, 2 * num_heads), lambda i: (i, 0))),
        compiler_params=par,
    )(x_p, w_bf16, attn_mat)

    a_dst = logits[:, :num_heads]                         # [N_pad, H]
    a_src_t = logits[:, num_heads:].T                     # [H, N_pad] (tiny XLA transpose)
    amax = jnp.max(logits[:N, num_heads:], axis=0, keepdims=True)   # [1, H] real rows only

    # ---- 2) masked edge-softmax + aggregation ------------------------------ #
    fuse = not batch_norm
    fuse_residual = fuse and residual

    attn_inputs = [adj_i8, a_dst, amax, a_src_t, featp, bias]
    attn_specs = [
        pl.BlockSpec((tm, tn), lambda i, k: (i, k)),              # adj (int8)
        pl.BlockSpec((tm, num_heads), lambda i, k: (i, 0)),       # a_dst rows
        pl.BlockSpec((1, num_heads), lambda i, k: (0, 0)),        # per-head src max
        pl.BlockSpec((num_heads, tn), lambda i, k: (0, k)),       # a_src^T chunk
        pl.BlockSpec((tn, hf + 1), lambda i, k: (k, 0)),          # feat_plus chunk
        pl.BlockSpec((1, hf), lambda i, k: (0, 0)),               # bias
    ]
    if fuse_residual:
        attn_inputs.append(x_p)
        attn_specs.append(pl.BlockSpec((tm, in_dim), lambda i, k: (i, 0)))

    attn_kernel = functools.partial(
        gat_attn_kernel, num_heads=num_heads, out_dim=out_dim, ep_dtype=ep_dtype,
        fuse_relu=fuse, fuse_residual=fuse_residual)

    h_pre = pl.pallas_call(
        attn_kernel,
        out_shape=jax.ShapeDtypeStruct((N_pad, hf), jnp.float32),
        grid=(grid_m, grid_n),
        in_specs=attn_specs,
        out_specs=pl.BlockSpec((tm, hf), lambda i, k: (i, 0)),
        scratch_shapes=[pltpu.VMEM((num_heads, tm, hf + 1), jnp.float32)],
        compiler_params=pltpu.CompilerParams(
            dimension_semantics=("parallel", "arbitrary"),
            vmem_limit_bytes=_attn_vmem_limit(tm, tn, hf, num_heads, in_dim,
                                              fuse_residual)),
    )(*attn_inputs)

    if not batch_norm:
        return h_pre[:N]                  # ReLU / residual already fused in attn

    # ---- 3) BatchNorm (batch stats over the N real rows) + ReLU + residual - #
    stats = pl.pallas_call(
        functools.partial(bn_stats_kernel, tile_m=tm, n_real=N),
        out_shape=jax.ShapeDtypeStruct((2, hf), jnp.float32),
        grid=(grid_m,),
        in_specs=[pl.BlockSpec((tm, hf), lambda i: (i, 0))],
        out_specs=pl.BlockSpec((2, hf), lambda i: (0, 0)),
        compiler_params=pltpu.CompilerParams(dimension_semantics=("arbitrary",)),
    )(h_pre)

    out_pad = pl.pallas_call(
        functools.partial(bn_apply_kernel, n_real=N, residual=residual),
        out_shape=jax.ShapeDtypeStruct((N_pad, hf), jnp.float32),
        grid=(grid_m,),
        in_specs=[pl.BlockSpec((tm, hf), lambda i: (i, 0)),
                  pl.BlockSpec((2, hf), lambda i: (0, 0)),
                  pl.BlockSpec((1, hf), lambda i: (0, 0)),
                  pl.BlockSpec((1, hf), lambda i: (0, 0)),
                  pl.BlockSpec((tm, in_dim), lambda i: (i, 0))],
        out_specs=pl.BlockSpec((tm, hf), lambda i: (i, 0)),
        compiler_params=par,
    )(h_pre, stats, gamma, beta, x_p)

    return out_pad[:N]


# --------------------------------------------------------------------------- #
# Pure-JAX reference
# --------------------------------------------------------------------------- #
def gat_layer_ref(x, adj, w, att_src, att_dst, bias, gamma, beta, *,
                  num_heads, out_dim, batch_norm, residual):
    """Pure-JAX f32 reference (PyG GATConv + BN + ReLU + residual)."""
    N, in_dim = x.shape
    if in_dim != out_dim * num_heads:
        residual = False
    feat = x @ w
    feat_h = feat.reshape(N, num_heads, out_dim)
    a_src = jnp.einsum('nhf,hf->nh', feat_h, att_src)
    a_dst = jnp.einsum('nhf,hf->nh', feat_h, att_dst)
    e = a_dst[:, None, :] + a_src[None, :, :]                      # [i, j, h]
    e = jnp.where(e > 0, e, NEG_SLOPE * e)
    e = jnp.where(adj[:, :, None] > 0, e, -1e30)
    m = jnp.max(e, axis=1, keepdims=True)
    p = jnp.exp(e - m) * adj[:, :, None]
    denom = jnp.maximum(jnp.sum(p, axis=1, keepdims=True), 1e-30)
    p = p / denom
    out = jnp.einsum('ijh,jhf->ihf', p, feat_h).reshape(N, num_heads * out_dim)
    out = out + bias.reshape(1, -1)
    if batch_norm:
        mu = jnp.mean(out, axis=0, keepdims=True)
        var = jnp.mean((out - mu) ** 2, axis=0, keepdims=True)
        out = (out - mu) / jnp.sqrt(var + BN_EPS) * gamma.reshape(1, -1) + beta.reshape(1, -1)
    out = jnp.maximum(out, 0.0)
    if residual:
        out = x + out
    return out


# --------------------------------------------------------------------------- #
# Demo / correctness check
# --------------------------------------------------------------------------- #
if __name__ == "__main__":
    N, in_dim, num_heads, out_dim = 256, 32, 4, 8    # in_dim == heads*out_dim -> residual on

    key = jax.random.PRNGKey(0)
    k1, k2, k3, k4, k5 = jax.random.split(key, 5)

    x = jax.random.normal(k1, (N, in_dim), jnp.float32)

    # Deterministic small graph: bidirectional ring -> edge_index [2, 2N]
    src = jnp.arange(N)
    dst = (src + 1) % N
    edge_index = jnp.stack([jnp.concatenate([src, dst]),
                            jnp.concatenate([dst, src])])          # row0 = src j, row1 = dst i
    adj = jnp.zeros((N, N), jnp.float32).at[edge_index[1], edge_index[0]].set(1.0)

    # Parameters (shapes match GATConv(in_dim, out_dim, heads) + BatchNorm1d)
    w = jax.random.normal(k2, (in_dim, num_heads * out_dim), jnp.float32) / jnp.sqrt(in_dim)
    att_src = jax.random.normal(k3, (num_heads, out_dim), jnp.float32) * 0.1
    att_dst = jax.random.normal(k4, (num_heads, out_dim), jnp.float32) * 0.1
    bias = jax.random.normal(k5, (1, num_heads * out_dim), jnp.float32) * 0.01
    gamma = jnp.ones((1, num_heads * out_dim), jnp.float32)        # BatchNorm1d weight
    beta = jnp.zeros((1, num_heads * out_dim), jnp.float32)        # BatchNorm1d bias

    # Config A: batch_norm=True, residual=True (full pipeline, tiled two-pass BN).
    out_bn = gat_layer(x, adj, w, att_src, att_dst, bias, gamma, beta,
                       num_heads=num_heads, out_dim=out_dim,
                       batch_norm=True, residual=True)
    out_bn = jax.block_until_ready(out_bn)
    ref_bn = gat_layer_ref(x, adj, w, att_src, att_dst, bias, gamma, beta,
                           num_heads=num_heads, out_dim=out_dim,
                           batch_norm=True, residual=True)
    np.testing.assert_allclose(np.asarray(out_bn), np.asarray(ref_bn),
                               rtol=5e-2, atol=5e-2)

    # Config B: batch_norm=False, residual=True (ReLU+residual fused into attn).
    out_nb = gat_layer(x, adj, w, att_src, att_dst, bias, gamma, beta,
                       num_heads=num_heads, out_dim=out_dim,
                       batch_norm=False, residual=True)
    out_nb = jax.block_until_ready(out_nb)
    ref_nb = gat_layer_ref(x, adj, w, att_src, att_dst, bias, gamma, beta,
                           num_heads=num_heads, out_dim=out_dim,
                           batch_norm=False, residual=True)
    np.testing.assert_allclose(np.asarray(out_nb), np.asarray(ref_nb),
                               rtol=5e-2, atol=5e-2)

    print("KERNEL_OK")
</pallas_src>

<mosaic_0001>
module attributes {stable_mosaic.version = 11 : i64} {
  func.func @gat_prep_kernel(%arg0: i32, %arg1: memref<256x32xf32, #tpu.memory_space<vmem>>, %arg2: memref<32x32xbf16, #tpu.memory_space<vmem>>, %arg3: memref<32x8xf32, #tpu.memory_space<vmem>>, %arg4: memref<256x33xbf16, #tpu.memory_space<vmem>>, %arg5: memref<256x8xf32, #tpu.memory_space<vmem>>) attributes {dimension_semantics = [#tpu.dimension_semantics<parallel>], iteration_bounds = array<i64: 1>, scalar_prefetch = 0 : i64, scratch_operands = 0 : i64, tpu.core_type = #tpu.core_type<tc>, window_params = [{transform_indices = @transform_0, window_bounds = array<i64: 256, 32>}, {pipeline_mode = #tpu.pipeline_mode<synchronous>, transform_indices = @transform_1, window_bounds = array<i64: 32, 32>}, {pipeline_mode = #tpu.pipeline_mode<synchronous>, transform_indices = @transform_2, window_bounds = array<i64: 32, 8>}, {transform_indices = @transform_3, window_bounds = array<i64: 256, 33>}, {transform_indices = @transform_4, window_bounds = array<i64: 256, 8>}]} {
    %c0 = arith.constant 0 : index
    %c0_0 = arith.constant 0 : index
    %0 = vector.load %arg1[%c0, %c0_0] : memref<256x32xf32, #tpu.memory_space<vmem>>, vector<256x32xf32>
    %1 = arith.truncf %0 : vector<256x32xf32> to vector<256x32xbf16>
    %c0_1 = arith.constant 0 : index
    %c0_2 = arith.constant 0 : index
    %2 = vector.load %arg2[%c0_1, %c0_2] : memref<32x32xbf16, #tpu.memory_space<vmem>>, vector<32x32xbf16>
    %cst = arith.constant dense<0.000000e+00> : vector<256x32xf32>
    %3 = tpu.matmul %1, %2, %cst {dimension_numbers = #tpu.dot_dimension_numbers<[1], [0], [0], [1], [0, 0, 1, 1], [], []>} : vector<256x32xbf16>, vector<32x32xbf16>, vector<256x32xf32> -> vector<256x32xf32>
    %cst_3 = arith.constant 1.000000e+00 : bf16
    %4 = vector.broadcast %cst_3 : bf16 to vector<256x1xbf16>
    %5 = arith.truncf %3 : vector<256x32xf32> to vector<256x32xbf16>
    %6 = tpu.concatenate %5, %4 in 1 : vector<256x32xbf16>, vector<256x1xbf16> -> vector<256x33xbf16>
    %c0_4 = arith.constant 0 : index
    %c0_5 = arith.constant 0 : index
    %7 = vector.load %arg4[%c0_4, %c0_5] : memref<256x33xbf16, #tpu.memory_space<vmem>>, vector<256x33xbf16>
    tpu.vector_store %arg4[%c0_4, %c0_5], %6 {strides = array<i32>} : memref<256x33xbf16, #tpu.memory_space<vmem>>, vector<256x33xbf16>,
    %c0_6 = arith.constant 0 : index
    %c0_7 = arith.constant 0 : index
    %8 = vector.load %arg3[%c0_6, %c0_7] : memref<32x8xf32, #tpu.memory_space<vmem>>, vector<32x8xf32>
    %cst_8 = arith.constant dense<0.000000e+00> : vector<256x8xf32>
    %9 = tpu.matmul %3, %8, %cst_8 {dimension_numbers = #tpu.dot_dimension_numbers<[1], [0], [0], [1], [0, 0, 1, 1], [], []>} : vector<256x32xf32>, vector<32x8xf32>, vector<256x8xf32> -> vector<256x8xf32>
    %c0_9 = arith.constant 0 : index
    %c0_10 = arith.constant 0 : index
    %10 = vector.load %arg5[%c0_9, %c0_10] : memref<256x8xf32, #tpu.memory_space<vmem>>, vector<256x8xf32>
    tpu.vector_store %arg5[%c0_9, %c0_10], %9 {strides = array<i32>} : memref<256x8xf32, #tpu.memory_space<vmem>>, vector<256x8xf32>,
    return
  }
  func.func @transform_0(%arg0: i32) -> (i32, i32) {
    %c0_i32 = arith.constant 0 : i32
    %c0_i32_0 = arith.constant 0 : i32
    return %arg0, %c0_i32 : i32, i32
  }
  func.func @transform_1(%arg0: i32) -> (i32, i32) {
    %c0_i32 = arith.constant 0 : i32
    %c0_i32_0 = arith.constant 0 : i32
    %c0_i32_1 = arith.constant 0 : i32
    return %c0_i32, %c0_i32_0 : i32, i32
  }
  func.func @transform_2(%arg0: i32) -> (i32, i32) {
    %c0_i32 = arith.constant 0 : i32
    %c0_i32_0 = arith.constant 0 : i32
    %c0_i32_1 = arith.constant 0 : i32
    return %c0_i32, %c0_i32_0 : i32, i32
  }
  func.func @transform_3(%arg0: i32) -> (i32, i32) {
    %c0_i32 = arith.constant 0 : i32
    %c0_i32_0 = arith.constant 0 : i32
    return %arg0, %c0_i32 : i32, i32
  }
  func.func @transform_4(%arg0: i32) -> (i32, i32) {
    %c0_i32 = arith.constant 0 : i32
    %c0_i32_0 = arith.constant 0 : i32
    return %arg0, %c0_i32 : i32, i32
  }
}

</mosaic_0001>

<llo_original>
// kernel: tpu_custom_call.1
$region0: #{tpu_custom_call.1}
  #allocation0 [shape = 'u32[]', space=smem, size = 0x4, offset = 0x4, fixed_abs, tag = 'smem constant byte address 0x4 - core index']
  #allocation1 [shape = 'u32[72,128]{1,0:T(1,128)}', space=vmem, size = 0x9000, scoped, tag = 'internal scratch']
  %s0 = inlined_call_operand.vmem [shape: f32[256,32], index: 0, kind: input, shape index: {}]
  %s1 = inlined_call_operand.vmem [shape: bf16[32,32], index: 1, kind: input, shape index: {}]
  %s2 = inlined_call_operand.vmem [shape: f32[32,8], index: 2, kind: input, shape index: {}]
  %s3 = inlined_call_operand.vmem [shape: bf16[256,33], index: 3, kind: output, shape index: {0}]
  %s4 = inlined_call_operand.vmem [shape: f32[256,8], index: 4, kind: output, shape index: {1}]
  %5 = xla_tuple %s3, %s4
  %s6 = sld [smem:[#allocation0]]
  $region30: #{tpu_custom_call.1} parent=0
    _
  %s8 = ssub.s32 1, %s6
  %s9 = scalar_select 0, %s8, %s6
  // Predicated region
  $region2: #{tpu_custom_call.1} parent=0 // pred_check
    _
  $region3: #{tpu_custom_call.1} parent=0 // pred_check_branch
    %11 = sbr.rel (0) target = $region5
  $region4: #{tpu_custom_call.1} parent=0 // pred_region
    _
  $region5: #{tpu_custom_call.1} parent=0 // pred_fallthru
    _
  // Predicated region
  $region6: #{tpu_custom_call.1} parent=0 // pred_check
    _
  $region7: #{tpu_custom_call.1} parent=0 // pred_check_branch
    %13 = sbr.rel (0) target = $region9
  $region8: #{tpu_custom_call.1} parent=0 // pred_region
    _
  $region9: #{tpu_custom_call.1} parent=0 // pred_fallthru
    _
  // Predicated region
  $region10: #{tpu_custom_call.1} parent=0 // pred_check
    _
  $region11: #{tpu_custom_call.1} parent=0 // pred_check_branch
    %15 = sbr.rel (0) target = $region13
  $region12: #{tpu_custom_call.1} parent=0 // pred_region
    _
  $region13: #{tpu_custom_call.1} parent=0 // pred_fallthru
    _
  %v18 = vld [vmem:[%s0] sm:$0xff]
  %v19 = vld [vmem:[%s0 + $0x8] sm:$0xff]
  %v20 = vld [vmem:[%s0 + $0x10] sm:$0xff]
  %v21 = vld [vmem:[%s0 + $0x18] sm:$0xff]
  %v22 = vld [vmem:[%s0 + $0x20] sm:$0xff]
  %v23 = vld [vmem:[%s0 + $0x28] sm:$0xff]
  %v24 = vld [vmem:[%s0 + $0x30] sm:$0xff]
  %v25 = vld [vmem:[%s0 + $0x38] sm:$0xff]
  %v26 = vld [vmem:[%s0 + $0x40] sm:$0xff]
  %v27 = vld [vmem:[%s0 + $0x48] sm:$0xff]
  %v28 = vld [vmem:[%s0 + $0x50] sm:$0xff]
  %v29 = vld [vmem:[%s0 + $0x58] sm:$0xff]
  %v30 = vld [vmem:[%s0 + $0x60] sm:$0xff]
  %v31 = vld [vmem:[%s0 + $0x68] sm:$0xff]
  %v32 = vld [vmem:[%s0 + $0x70] sm:$0xff]
  %v33 = vld [vmem:[%s0 + $0x78] sm:$0xff]
  %v34 = vld [vmem:[%s0 + $0x80] sm:$0xff]
  %v35 = vld [vmem:[%s0 + $0x88] sm:$0xff]
  %v36 = vld [vmem:[%s0 + $0x90] sm:$0xff]
  %v37 = vld [vmem:[%s0 + $0x98] sm:$0xff]
  %v38 = vld [vmem:[%s0 + $0xa0] sm:$0xff]
  %v39 = vld [vmem:[%s0 + $0xa8] sm:$0xff]
  %v40 = vld [vmem:[%s0 + $0xb0] sm:$0xff]
  %v41 = vld [vmem:[%s0 + $0xb8] sm:$0xff]
  %v42 = vld [vmem:[%s0 + $0xc0] sm:$0xff]
  %v43 = vld [vmem:[%s0 + $0xc8] sm:$0xff]
  %v44 = vld [vmem:[%s0 + $0xd0] sm:$0xff]
  %v45 = vld [vmem:[%s0 + $0xd8] sm:$0xff]
  %v46 = vld [vmem:[%s0 + $0xe0] sm:$0xff]
  %v47 = vld [vmem:[%s0 + $0xe8] sm:$0xff]
  %v48 = vld [vmem:[%s0 + $0xf0] sm:$0xff]
  %v49 = vld [vmem:[%s0 + $0xf8] sm:$0xff]
  %v50 = vpack.c.bf16 %v19, %v18
  %v51 = vpack.c.bf16 %v21, %v20
  %v52 = vpack.c.bf16 %v23, %v22
  %v53 = vpack.c.bf16 %v25, %v24
  %v54 = vpack.c.bf16 %v27, %v26
  %v55 = vpack.c.bf16 %v29, %v28
  %v56 = vpack.c.bf16 %v31, %v30
  %v57 = vpack.c.bf16 %v33, %v32
  %v58 = vpack.c.bf16 %v35, %v34
  %v59 = vpack.c.bf16 %v37, %v36
  %v60 = vpack.c.bf16 %v39, %v38
  %v61 = vpack.c.bf16 %v41, %v40
  %v62 = vpack.c.bf16 %v43, %v42
  %v63 = vpack.c.bf16 %v45, %v44
  %v64 = vpack.c.bf16 %v47, %v46
  %v65 = vpack.c.bf16 %v49, %v48
  %v66 = vld [vmem:[%s1] sm:$0xf]
  %v67 = vld [vmem:[%s1 + $0x4] sm:$0xf]
  %v68 = vld [vmem:[%s1 + $0x8] sm:$0xf]
  %v69 = vld [vmem:[%s1 + $0xc] sm:$0xf]
  %v74 = vunpack.c.l.b16 %v66
  %v75 = vunpack.c.l.b16 %v67
  %v76 = vunpack.c.l.b16 %v68
  %v77 = vunpack.c.l.b16 %v69
  %v78 = vpack.c.b16 %v75, %v74
  %v79 = vpack.c.b16 %v77, %v76
  %vm82 = vcmask 261120
  %v84 = vsel %vm82, %v50, 0
  %v87 = vsel %vm82, %v51, 0
  %v90 = vsel %vm82, %v52, 0
  %v93 = vsel %vm82, %v53, 0
  %v96 = vsel %vm82, %v54, 0
  %v99 = vsel %vm82, %v55, 0
  %v102 = vsel %vm82, %v56, 0
  %v105 = vsel %vm82, %v57, 0
  %v108 = vsel %vm82, %v58, 0
  %v111 = vsel %vm82, %v59, 0
  %v114 = vsel %vm82, %v60, 0
  %v117 = vsel %vm82, %v61, 0
  %v120 = vsel %vm82, %v62, 0
  %v123 = vsel %vm82, %v63, 0
  %v126 = vsel %vm82, %v64, 0
  %v129 = vsel %vm82, %v65, 0
  %131 = vmatpush.bf16.msra.mxu0 0
  %132 = vmatpush.bf16.msra.mxu0 0
  %133 = vmatpush.bf16.msra.mxu0 0
  %134 = vmatpush.bf16.msra.mxu0 0
  %135 = vmatpush.bf16.msra.mxu0 0
  %136 = vmatpush.bf16.msra.mxu0 0
  %137 = vmatpush.bf16.msra.mxu0 %v79
  %138 = vmatpush.bf16.msra.mxu0 %v78
  %139 = vmatmul.bf16.gmra.mxu0 %v84
  %v140 = vpop.f32.mrf.mxu0
  %v141 = vadd.f32 0.0, %v140
  %v142 = vpop.f32.mrf.mxu0
  %v143 = vadd.f32 0.0, %v142
  %144 = vmatmul.bf16.gmra.mxu0 %v87
  %v145 = vpop.f32.mrf.mxu0
  %v146 = vadd.f32 0.0, %v145
  %v147 = vpop.f32.mrf.mxu0
  %v148 = vadd.f32 0.0, %v147
  %149 = vmatmul.bf16.gmra.mxu0 %v90
  %v150 = vpop.f32.mrf.mxu0
  %v151 = vadd.f32 0.0, %v150
  %v152 = vpop.f32.mrf.mxu0
  %v153 = vadd.f32 0.0, %v152
  %154 = vmatmul.bf16.gmra.mxu0 %v93
  %v155 = vpop.f32.mrf.mxu0
  %v156 = vadd.f32 0.0, %v155
  %v157 = vpop.f32.mrf.mxu0
  %v158 = vadd.f32 0.0, %v157
  %159 = vmatmul.bf16.gmra.mxu0 %v96
  %v160 = vpop.f32.mrf.mxu0
  %v161 = vadd.f32 0.0, %v160
  %v162 = vpop.f32.mrf.mxu0
  %v163 = vadd.f32 0.0, %v162
  %164 = vmatmul.bf16.gmra.mxu0 %v99
  %v165 = vpop.f32.mrf.mxu0
  %v166 = vadd.f32 0.0, %v165
  %v167 = vpop.f32.mrf.mxu0
  %v168 = vadd.f32 0.0, %v167
  %169 = vmatmul.bf16.gmra.mxu0 %v102
  %v170 = vpop.f32.mrf.mxu0
  %v171 = vadd.f32 0.0, %v170
  %v172 = vpop.f32.mrf.mxu0
  %v173 = vadd.f32 0.0, %v172
  %174 = vmatmul.bf16.gmra.mxu0 %v105
  %v175 = vpop.f32.mrf.mxu0
  %v176 = vadd.f32 0.0, %v175
  %v177 = vpop.f32.mrf.mxu0
  %v178 = vadd.f32 0.0, %v177
  %179 = vmatmul.bf16.gmra.mxu0 %v108
  %v180 = vpop.f32.mrf.mxu0
  %v181 = vadd.f32 0.0, %v180
  %v182 = vpop.f32.mrf.mxu0
  %v183 = vadd.f32 0.0, %v182
  %184 = vmatmul.bf16.gmra.mxu0 %v111
  %v185 = vpop.f32.mrf.mxu0
  %v186 = vadd.f32 0.0, %v185
  %v187 = vpop.f32.mrf.mxu0
  %v188 = vadd.f32 0.0, %v187
  %189 = vmatmul.bf16.gmra.mxu0 %v114
  %v190 = vpop.f32.mrf.mxu0
  %v191 = vadd.f32 0.0, %v190
  %v192 = vpop.f32.mrf.mxu0
  %v193 = vadd.f32 0.0, %v192
  %194 = vmatmul.bf16.gmra.mxu0 %v117
  %v195 = vpop.f32.mrf.mxu0
  %v196 = vadd.f32 0.0, %v195
  %v197 = vpop.f32.mrf.mxu0
  %v198 = vadd.f32 0.0, %v197
  %199 = vmatmul.bf16.gmra.mxu0 %v120
  %v200 = vpop.f32.mrf.mxu0
  %v201 = vadd.f32 0.0, %v200
  %v202 = vpop.f32.mrf.mxu0
  %v203 = vadd.f32 0.0, %v202
  %204 = vmatmul.bf16.gmra.mxu0 %v123
  %v205 = vpop.f32.mrf.mxu0
  %v206 = vadd.f32 0.0, %v205
  %v207 = vpop.f32.mrf.mxu0
  %v208 = vadd.f32 0.0, %v207
  %209 = vmatmul.bf16.gmra.mxu0 %v126
  %v210 = vpop.f32.mrf.mxu0
  %v211 = vadd.f32 0.0, %v210
  %v212 = vpop.f32.mrf.mxu0
  %v213 = vadd.f32 0.0, %v212
  %214 = vmatmul.bf16.gmra.mxu0 %v129
  %v215 = vpop.f32.mrf.mxu0
  %v216 = vadd.f32 0.0, %v215
  %v217 = vpop.f32.mrf.mxu0
  %v218 = vadd.f32 0.0, %v217
  %219 = vdwg.mxu0
  %v220 = vpack.c.bf16 %v141, %v141
  %v221 = vpack.c.bf16 %v143, %v143
  %v222 = vpack.c.bf16 %v146, %v146
  %v223 = vpack.c.bf16 %v148, %v148
  %v224 = vpack.c.bf16 %v151, %v151
  %v225 = vpack.c.bf16 %v153, %v153
  %v226 = vpack.c.bf16 %v156, %v156
  %v227 = vpack.c.bf16 %v158, %v158
  %v228 = vpack.c.bf16 %v161, %v161
  %v229 = vpack.c.bf16 %v163, %v163
  %v230 = vpack.c.bf16 %v166, %v166
  %v231 = vpack.c.bf16 %v168, %v168
  %v232 = vpack.c.bf16 %v171, %v171
  %v233 = vpack.c.bf16 %v173, %v173
  %v234 = vpack.c.bf16 %v176, %v176
  %v235 = vpack.c.bf16 %v178, %v178
  %v236 = vpack.c.bf16 %v181, %v181
  %v237 = vpack.c.bf16 %v183, %v183
  %v238 = vpack.c.bf16 %v186, %v186
  %v239 = vpack.c.bf16 %v188, %v188
  %v240 = vpack.c.bf16 %v191, %v191
  %v241 = vpack.c.bf16 %v193, %v193
  %v242 = vpack.c.bf16 %v196, %v196
  %v243 = vpack.c.bf16 %v198, %v198
  %v244 = vpack.c.bf16 %v201, %v201
  %v245 = vpack.c.bf16 %v203, %v203
  %v246 = vpack.c.bf16 %v206, %v206
  %v247 = vpack.c.bf16 %v208, %v208
  %v248 = vpack.c.bf16 %v211, %v211
  %v249 = vpack.c.bf16 %v213, %v213
  %v250 = vpack.c.bf16 %v216, %v216
  %v251 = vpack.c.bf16 %v218, %v218
  %v284 = vunpack.c.l.b16 %v220
  %v285 = vunpack.c.l.b16 %v221
  %v286 = vunpack.c.l.b16 %v222
  %v287 = vunpack.c.l.b16 %v223
  %v288 = vunpack.c.l.b16 %v224
  %v289 = vunpack.c.l.b16 %v225
  %v290 = vunpack.c.l.b16 %v226
  %v291 = vunpack.c.l.b16 %v227
  %v292 = vunpack.c.l.b16 %v228
  %v293 = vunpack.c.l.b16 %v229
  %v294 = vunpack.c.l.b16 %v230
  %v295 = vunpack.c.l.b16 %v231
  %v296 = vunpack.c.l.b16 %v232
  %v297 = vunpack.c.l.b16 %v233
  %v298 = vunpack.c.l.b16 %v234
  %v299 = vunpack.c.l.b16 %v235
  %v300 = vunpack.c.l.b16 %v236
  %v301 = vunpack.c.l.b16 %v237
  %v302 = vunpack.c.l.b16 %v238
  %v303 = vunpack.c.l.b16 %v239
  %v304 = vunpack.c.l.b16 %v240
  %v305 = vunpack.c.l.b16 %v241
  %v306 = vunpack.c.l.b16 %v242
  %v307 = vunpack.c.l.b16 %v243
  %v308 = vunpack.c.l.b16 %v244
  %v309 = vunpack.c.l.b16 %v245
  %v310 = vunpack.c.l.b16 %v246
  %v311 = vunpack.c.l.b16 %v247
  %v312 = vunpack.c.l.b16 %v248
  %v313 = vunpack.c.l.b16 %v249
  %v314 = vunpack.c.l.b16 %v250
  %v315 = vunpack.c.l.b16 %v251
  %v316 = vpack.c.b16 %v285, %v284
  %v317 = vpack.c.b16 %v287, %v286
  %v318 = vpack.c.b16 %v289, %v288
  %v319 = vpack.c.b16 %v291, %v290
  %v320 = vpack.c.b16 %v293, %v292
  %v321 = vpack.c.b16 %v295, %v294
  %v322 = vpack.c.b16 %v297, %v296
  %v323 = vpack.c.b16 %v299, %v298
  %v324 = vpack.c.b16 %v301, %v300
  %v325 = vpack.c.b16 %v303, %v302
  %v326 = vpack.c.b16 %v305, %v304
  %v327 = vpack.c.b16 %v307, %v306
  %v328 = vpack.c.b16 %v309, %v308
  %v329 = vpack.c.b16 %v311, %v310
  %v330 = vpack.c.b16 %v313, %v312
  %v331 = vpack.c.b16 %v315, %v314
  %v334 = vsel %vm82, %v316, 1065369472
  %v336 = vsel %vm82, %v317, 1065369472
  %v338 = vsel %vm82, %v318, 1065369472
  %v340 = vsel %vm82, %v319, 1065369472
  %v342 = vsel %vm82, %v320, 1065369472
  %v344 = vsel %vm82, %v321, 1065369472
  %v346 = vsel %vm82, %v322, 1065369472
  %v348 = vsel %vm82, %v323, 1065369472
  %v350 = vsel %vm82, %v324, 1065369472
  %v352 = vsel %vm82, %v325, 1065369472
  %v354 = vsel %vm82, %v326, 1065369472
  %v356 = vsel %vm82, %v327, 1065369472
  %v358 = vsel %vm82, %v328, 1065369472
  %v360 = vsel %vm82, %v329, 1065369472
  %v362 = vsel %vm82, %v330, 1065369472
  %v364 = vsel %vm82, %v331, 1065369472
  %v381 = vunpack.c.l.b16 %v334
  %v382 = vunpack.c.h.b16 %v334
  %v383 = vunpack.c.l.b16 %v336
  %v384 = vunpack.c.h.b16 %v336
  %v385 = vunpack.c.l.b16 %v338
  %v386 = vunpack.c.h.b16 %v338
  %v387 = vunpack.c.l.b16 %v340
  %v388 = vunpack.c.h.b16 %v340
  %v389 = vunpack.c.l.b16 %v342
  %v390 = vunpack.c.h.b16 %v342
  %v391 = vunpack.c.l.b16 %v344
  %v392 = vunpack.c.h.b16 %v344
  %v393 = vunpack.c.l.b16 %v346
  %v394 = vunpack.c.h.b16 %v346
  %v395 = vunpack.c.l.b16 %v348
  %v396 = vunpack.c.h.b16 %v348
  %v397 = vunpack.c.l.b16 %v350
  %v398 = vunpack.c.h.b16 %v350
  %v399 = vunpack.c.l.b16 %v352
  %v400 = vunpack.c.h.b16 %v352
  %v401 = vunpack.c.l.b16 %v354
  %v402 = vunpack.c.h.b16 %v354
  %v403 = vunpack.c.l.b16 %v356
  %v404 = vunpack.c.h.b16 %v356
  %v405 = vunpack.c.l.b16 %v358
  %v406 = vunpack.c.h.b16 %v358
  %v407 = vunpack.c.l.b16 %v360
  %v408 = vunpack.c.h.b16 %v360
  %v409 = vunpack.c.l.b16 %v362
  %v410 = vunpack.c.h.b16 %v362
  %v411 = vunpack.c.l.b16 %v364
  %v412 = vunpack.c.h.b16 %v364
  %v413 = vpack.c.b16 %v381, %v381
  %v414 = vpack.c.b16 %v382, %v382
  %v415 = vpack.c.b16 %v383, %v383
  %v416 = vpack.c.b16 %v384, %v384
  %v417 = vpack.c.b16 %v385, %v385
  %v418 = vpack.c.b16 %v386, %v386
  %v419 = vpack.c.b16 %v387, %v387
  %v420 = vpack.c.b16 %v388, %v388
  %v421 = vpack.c.b16 %v389, %v389
  %v422 = vpack.c.b16 %v390, %v390
  %v423 = vpack.c.b16 %v391, %v391
  %v424 = vpack.c.b16 %v392, %v392
  %v425 = vpack.c.b16 %v393, %v393
  %v426 = vpack.c.b16 %v394, %v394
  %v427 = vpack.c.b16 %v395, %v395
  %v428 = vpack.c.b16 %v396, %v396
  %v429 = vpack.c.b16 %v397, %v397
  %v430 = vpack.c.b16 %v398, %v398
  %v431 = vpack.c.b16 %v399, %v399
  %v432 = vpack.c.b16 %v400, %v400
  %v433 = vpack.c.b16 %v401, %v401
  %v434 = vpack.c.b16 %v402, %v402
  %v435 = vpack.c.b16 %v403, %v403
  %v436 = vpack.c.b16 %v404, %v404
  %v437 = vpack.c.b16 %v405, %v405
  %v438 = vpack.c.b16 %v406, %v406
  %v439 = vpack.c.b16 %v407, %v407
  %v440 = vpack.c.b16 %v408, %v408
  %v441 = vpack.c.b16 %v409, %v409
  %v442 = vpack.c.b16 %v410, %v410
  %v443 = vpack.c.b16 %v411, %v411
  %v444 = vpack.c.b16 %v412, %v412
  %vm477 = vcmask 265216
  %478 = vst.msk [vmem:[%s3] sm:$0xf] %vm477, %v413
  %479 = vst.msk [vmem:[%s3 + $0x4] sm:$0xf] %vm477, %v414
  %480 = vst.msk [vmem:[%s3 + $0x8] sm:$0xf] %vm477, %v415
  %481 = vst.msk [vmem:[%s3 + $0xc] sm:$0xf] %vm477, %v416
  %482 = vst.msk [vmem:[%s3 + $0x10] sm:$0xf] %vm477, %v417
  %483 = vst.msk [vmem:[%s3 + $0x14] sm:$0xf] %vm477, %v418
  %484 = vst.msk [vmem:[%s3 + $0x18] sm:$0xf] %vm477, %v419
  %485 = vst.msk [vmem:[%s3 + $0x1c] sm:$0xf] %vm477, %v420
  %486 = vst.msk [vmem:[%s3 + $0x20] sm:$0xf] %vm477, %v421
  %487 = vst.msk [vmem:[%s3 + $0x24] sm:$0xf] %vm477, %v422
  %488 = vst.msk [vmem:[%s3 + $0x28] sm:$0xf] %vm477, %v423
  %489 = vst.msk [vmem:[%s3 + $0x2c] sm:$0xf] %vm477, %v424
  %490 = vst.msk [vmem:[%s3 + $0x30] sm:$0xf] %vm477, %v425
  %491 = vst.msk [vmem:[%s3 + $0x34] sm:$0xf] %vm477, %v426
  %492 = vst.msk [vmem:[%s3 + $0x38] sm:$0xf] %vm477, %v427
  %493 = vst.msk [vmem:[%s3 + $0x3c] sm:$0xf] %vm477, %v428
  %494 = vst.msk [vmem:[%s3 + $0x40] sm:$0xf] %vm477, %v429
  %495 = vst.msk [vmem:[%s3 + $0x44] sm:$0xf] %vm477, %v430
  %496 = vst.msk [vmem:[%s3 + $0x48] sm:$0xf] %vm477, %v431
  %497 = vst.msk [vmem:[%s3 + $0x4c] sm:$0xf] %vm477, %v432
  %498 = vst.msk [vmem:[%s3 + $0x50] sm:$0xf] %vm477, %v433
  %499 = vst.msk [vmem:[%s3 + $0x54] sm:$0xf] %vm477, %v434
  %500 = vst.msk [vmem:[%s3 + $0x58] sm:$0xf] %vm477, %v435
  %501 = vst.msk [vmem:[%s3 + $0x5c] sm:$0xf] %vm477, %v436
  %502 = vst.msk [vmem:[%s3 + $0x60] sm:$0xf] %vm477, %v437
  %503 = vst.msk [vmem:[%s3 + $0x64] sm:$0xf] %vm477, %v438
  %504 = vst.msk [vmem:[%s3 + $0x68] sm:$0xf] %vm477, %v439
  %505 = vst.msk [vmem:[%s3 + $0x6c] sm:$0xf] %vm477, %v440
  %506 = vst.msk [vmem:[%s3 + $0x70] sm:$0xf] %vm477, %v441
  %507 = vst.msk [vmem:[%s3 + $0x74] sm:$0xf] %vm477, %v442
  %508 = vst.msk [vmem:[%s3 + $0x78] sm:$0xf] %vm477, %v443
  %509 = vst.msk [vmem:[%s3 + $0x7c] sm:$0xf] %vm477, %v444
  %v510 = vld [vmem:[%s2] sm:$0xff]
  %v511 = vld [vmem:[%s2 + $0x8] sm:$0xff]
  %v512 = vld [vmem:[%s2 + $0x10] sm:$0xff]
  %v513 = vld [vmem:[%s2 + $0x18] sm:$0xff]
  %v515 = vsel %vm82, %v141, 0
  %v518 = vsel %vm82, %v143, 0
  %v521 = vsel %vm82, %v146, 0
  %v524 = vsel %vm82, %v148, 0
  %v527 = vsel %vm82, %v151, 0
  %v530 = vsel %vm82, %v153, 0
  %v533 = vsel %vm82, %v156, 0
  %v536 = vsel %vm82, %v158, 0
  %v539 = vsel %vm82, %v161, 0
  %v542 = vsel %vm82, %v163, 0
  %v545 = vsel %vm82, %v166, 0
  %v548 = vsel %vm82, %v168, 0
  %v551 = vsel %vm82, %v171, 0
  %v554 = vsel %vm82, %v173, 0
  %v557 = vsel %vm82, %v176, 0
  %v560 = vsel %vm82, %v178, 0
  %v563 = vsel %vm82, %v181, 0
  %v566 = vsel %vm82, %v183, 0
  %v569 = vsel %vm82, %v186, 0
  %v572 = vsel %vm82, %v188, 0
  %v575 = vsel %vm82, %v191, 0
  %v578 = vsel %vm82, %v193, 0
  %v581 = vsel %vm82, %v196, 0
  %v584 = vsel %vm82, %v198, 0
  %v587 = vsel %vm82, %v201, 0
  %v590 = vsel %vm82, %v203, 0
  %v593 = vsel %vm82, %v206, 0
  %v596 = vsel %vm82, %v208, 0
  %v599 = vsel %vm82, %v211, 0
  %v602 = vsel %vm82, %v213, 0
  %v605 = vsel %vm82, %v216, 0
  %v608 = vsel %vm82, %v218, 0
  %610 = vmatpush.msra.mxu0 0.0
  %611 = vmatpush.msra.mxu0 0.0
  %612 = vmatpush.msra.mxu0 0.0
  %613 = vmatpush.msra.mxu0 0.0
  %614 = vmatpush.msra.mxu0 0.0
  %615 = vmatpush.msra.mxu0 0.0
  %616 = vmatpush.msra.mxu0 0.0
  %617 = vmatpush.msra.mxu0 0.0
  %618 = vmatpush.msra.mxu0 0.0
  %619 = vmatpush.msra.mxu0 0.0
  %620 = vmatpush.msra.mxu0 0.0
  %621 = vmatpush.msra.mxu0 0.0
  %622 = vmatpush.msra.mxu0 %v513
  %623 = vmatpush.msra.mxu0 %v512
  %624 = vmatpush.msra.mxu0 %v511
  %625 = vmatpush.msra.mxu0 %v510
  %626 = vmatmul.f32.gmra.mxu0 %v515
  %v627 = vpop.f32.mrf.mxu0
  %v628 = vadd.f32 0.0, %v627
  %629 = vmatmul.f32.gmra.mxu0 %v518
  %v630 = vpop.f32.mrf.mxu0
  %v631 = vadd.f32 0.0, %v630
  %632 = vmatmul.f32.gmra.mxu0 %v521
  %v633 = vpop.f32.mrf.mxu0
  %v634 = vadd.f32 0.0, %v633
  %635 = vmatmul.f32.gmra.mxu0 %v524
  %v636 = vpop.f32.mrf.mxu0
  %v637 = vadd.f32 0.0, %v636
  %638 = vmatmul.f32.gmra.mxu0 %v527
  %v639 = vpop.f32.mrf.mxu0
  %v640 = vadd.f32 0.0, %v639
  %641 = vmatmul.f32.gmra.mxu0 %v530
  %v642 = vpop.f32.mrf.mxu0
  %v643 = vadd.f32 0.0, %v642
  %644 = vmatmul.f32.gmra.mxu0 %v533
  %v645 = vpop.f32.mrf.mxu0
  %v646 = vadd.f32 0.0, %v645
  %647 = vmatmul.f32.gmra.mxu0 %v536
  %v648 = vpop.f32.mrf.mxu0
  %v649 = vadd.f32 0.0, %v648
  %650 = vmatmul.f32.gmra.mxu0 %v539
  %v651 = vpop.f32.mrf.mxu0
  %v652 = vadd.f32 0.0, %v651
  %653 = vmatmul.f32.gmra.mxu0 %v542
  %v654 = vpop.f32.mrf.mxu0
  %v655 = vadd.f32 0.0, %v654
  %656 = vmatmul.f32.gmra.mxu0 %v545
  %v657 = vpop.f32.mrf.mxu0
  %v658 = vadd.f32 0.0, %v657
  %659 = vmatmul.f32.gmra.mxu0 %v548
  %v660 = vpop.f32.mrf.mxu0
  %v661 = vadd.f32 0.0, %v660
  %662 = vmatmul.f32.gmra.mxu0 %v551
  %v663 = vpop.f32.mrf.mxu0
  %v664 = vadd.f32 0.0, %v663
  %665 = vmatmul.f32.gmra.mxu0 %v554
  %v666 = vpop.f32.mrf.mxu0
  %v667 = vadd.f32 0.0, %v666
  %668 = vmatmul.f32.gmra.mxu0 %v557
  %v669 = vpop.f32.mrf.mxu0
  %v670 = vadd.f32 0.0, %v669
  %671 = vmatmul.f32.gmra.mxu0 %v560
  %v672 = vpop.f32.mrf.mxu0
  %v673 = vadd.f32 0.0, %v672
  %674 = vmatmul.f32.gmra.mxu0 %v563
  %v675 = vpop.f32.mrf.mxu0
  %v676 = vadd.f32 0.0, %v675
  %677 = vmatmul.f32.gmra.mxu0 %v566
  %v678 = vpop.f32.mrf.mxu0
  %v679 = vadd.f32 0.0, %v678
  %680 = vmatmul.f32.gmra.mxu0 %v569
  %v681 = vpop.f32.mrf.mxu0
  %v682 = vadd.f32 0.0, %v681
  %683 = vmatmul.f32.gmra.mxu0 %v572
  %v684 = vpop.f32.mrf.mxu0
  %v685 = vadd.f32 0.0, %v684
  %686 = vmatmul.f32.gmra.mxu0 %v575
  %v687 = vpop.f32.mrf.mxu0
  %v688 = vadd.f32 0.0, %v687
  %689 = vmatmul.f32.gmra.mxu0 %v578
  %v690 = vpop.f32.mrf.mxu0
  %v691 = vadd.f32 0.0, %v690
  %692 = vmatmul.f32.gmra.mxu0 %v581
  %v693 = vpop.f32.mrf.mxu0
  %v694 = vadd.f32 0.0, %v693
  %695 = vmatmul.f32.gmra.mxu0 %v584
  %v696 = vpop.f32.mrf.mxu0
  %v697 = vadd.f32 0.0, %v696
  %698 = vmatmul.f32.gmra.mxu0 %v587
  %v699 = vpop.f32.mrf.mxu0
  %v700 = vadd.f32 0.0, %v699
  %701 = vmatmul.f32.gmra.mxu0 %v590
  %v702 = vpop.f32.mrf.mxu0
  %v703 = vadd.f32 0.0, %v702
  %704 = vmatmul.f32.gmra.mxu0 %v593
  %v705 = vpop.f32.mrf.mxu0
  %v706 = vadd.f32 0.0, %v705
  %707 = vmatmul.f32.gmra.mxu0 %v596
  %v708 = vpop.f32.mrf.mxu0
  %v709 = vadd.f32 0.0, %v708
  %710 = vmatmul.f32.gmra.mxu0 %v599
  %v711 = vpop.f32.mrf.mxu0
  %v712 = vadd.f32 0.0, %v711
  %713 = vmatmul.f32.gmra.mxu0 %v602
  %v714 = vpop.f32.mrf.mxu0
  %v715 = vadd.f32 0.0, %v714
  %716 = vmatmul.f32.gmra.mxu0 %v605
  %v717 = vpop.f32.mrf.mxu0
  %v718 = vadd.f32 0.0, %v717
  %719 = vmatmul.f32.gmra.mxu0 %v608
  %v720 = vpop.f32.mrf.mxu0
  %v721 = vadd.f32 0.0, %v720
  %722 = vdwg.mxu0
  %vm723 = vcmask 64512
  %724 = vst.msk [vmem:[%s4] sm:$0xff] %vm723, %v628
  %725 = vst.msk [vmem:[%s4 + $0x8] sm:$0xff] %vm723, %v631
  %726 = vst.msk [vmem:[%s4 + $0x10] sm:$0xff] %vm723, %v634
  %727 = vst.msk [vmem:[%s4 + $0x18] sm:$0xff] %vm723, %v637
  %728 = vst.msk [vmem:[%s4 + $0x20] sm:$0xff] %vm723, %v640
  %729 = vst.msk [vmem:[%s4 + $0x28] sm:$0xff] %vm723, %v643
  %730 = vst.msk [vmem:[%s4 + $0x30] sm:$0xff] %vm723, %v646
  %731 = vst.msk [vmem:[%s4 + $0x38] sm:$0xff] %vm723, %v649
  %732 = vst.msk [vmem:[%s4 + $0x40] sm:$0xff] %vm723, %v652
  %733 = vst.msk [vmem:[%s4 + $0x48] sm:$0xff] %vm723, %v655
  %734 = vst.msk [vmem:[%s4 + $0x50] sm:$0xff] %vm723, %v658
  %735 = vst.msk [vmem:[%s4 + $0x58] sm:$0xff] %vm723, %v661
  %736 = vst.msk [vmem:[%s4 + $0x60] sm:$0xff] %vm723, %v664
  %737 = vst.msk [vmem:[%s4 + $0x68] sm:$0xff] %vm723, %v667
  %738 = vst.msk [vmem:[%s4 + $0x70] sm:$0xff] %vm723, %v670
  %739 = vst.msk [vmem:[%s4 + $0x78] sm:$0xff] %vm723, %v673
  %740 = vst.msk [vmem:[%s4 + $0x80] sm:$0xff] %vm723, %v676
  %741 = vst.msk [vmem:[%s4 + $0x88] sm:$0xff] %vm723, %v679
  %742 = vst.msk [vmem:[%s4 + $0x90] sm:$0xff] %vm723, %v682
  %743 = vst.msk [vmem:[%s4 + $0x98] sm:$0xff] %vm723, %v685
  %744 = vst.msk [vmem:[%s4 + $0xa0] sm:$0xff] %vm723, %v688
  %745 = vst.msk [vmem:[%s4 + $0xa8] sm:$0xff] %vm723, %v691
  %746 = vst.msk [vmem:[%s4 + $0xb0] sm:$0xff] %vm723, %v694
  %747 = vst.msk [vmem:[%s4 + $0xb8] sm:$0xff] %vm723, %v697
  %748 = vst.msk [vmem:[%s4 + $0xc0] sm:$0xff] %vm723, %v700
  %749 = vst.msk [vmem:[%s4 + $0xc8] sm:$0xff] %vm723, %v703
  %750 = vst.msk [vmem:[%s4 + $0xd0] sm:$0xff] %vm723, %v706
  %751 = vst.msk [vmem:[%s4 + $0xd8] sm:$0xff] %vm723, %v709
  %752 = vst.msk [vmem:[%s4 + $0xe0] sm:$0xff] %vm723, %v712
  %753 = vst.msk [vmem:[%s4 + $0xe8] sm:$0xff] %vm723, %v715
  %754 = vst.msk [vmem:[%s4 + $0xf0] sm:$0xff] %vm723, %v718
  %755 = vst.msk [vmem:[%s4 + $0xf8] sm:$0xff] %vm723, %v721
  // Predicated region
  $region14: #{tpu_custom_call.1} parent=0 // pred_check
    _
  $region15: #{tpu_custom_call.1} parent=0 // pred_check_branch
    %757 = sbr.rel (0) target = $region17
  $region16: #{tpu_custom_call.1} parent=0 // pred_region
    _
  $region17: #{tpu_custom_call.1} parent=0 // pred_fallthru
    _
  // Predicated region
  $region18: #{tpu_custom_call.1} parent=0 // pred_check
    _
  $region19: #{tpu_custom_call.1} parent=0 // pred_check_branch
    %759 = sbr.rel (0) target = $region21
  $region20: #{tpu_custom_call.1} parent=0 // pred_region
    _
  $region21: #{tpu_custom_call.1} parent=0 // pred_fallthru
    _
  // Predicated region
  $region22: #{tpu_custom_call.1} parent=0 // pred_check
    _
  $region23: #{tpu_custom_call.1} parent=0 // pred_check_branch
    %761 = sbr.rel (0) target = $region25
  $region24: #{tpu_custom_call.1} parent=0 // pred_region
    _
  $region25: #{tpu_custom_call.1} parent=0 // pred_fallthru
    _
  // Predicated region
  $region26: #{tpu_custom_call.1} parent=0 // pred_check
    _
  $region27: #{tpu_custom_call.1} parent=0 // pred_check_branch
    %763 = sbr.rel (0) target = $region29
  $region28: #{tpu_custom_call.1} parent=0 // pred_region
    _
  $region29: #{tpu_custom_call.1} parent=0 // pred_fallthru
    _

</llo_original>
